<compile_context>
chip_gen: v6e
topology: v6e:2x2x1
jax: 0.10.0
libtpu: 0.0.40
codegen_flags: <defaults>
</compile_context>

<pallas_src>
import functools

import jax
import jax.numpy as jnp
from jax.experimental import pallas as pl
from jax.experimental.pallas import tpu as pltpu


_LANE = 128          # feature dim padded to this (lane-dense output stores)
_TM_TARGET = 512     # output-row tile target (tiled path)
_TK_TARGET = 1024    # contraction (neighbor) tile target (tiled path)


def _round_up(x, m):
    return ((x + m - 1) // m) * m


def _pad2(a, rows, cols):
    return jnp.pad(a, ((0, rows - a.shape[0]), (0, cols - a.shape[1])))


def _vmem_capacity_bytes():
    """Physical per-core VMEM; conservative v7x default if the query fails."""
    try:
        return int(getattr(pltpu.get_tpu_info(), "vmem_capacity_bytes"))
    except Exception:
        return 64 * 1024 * 1024


def _budgets():
    cap = _vmem_capacity_bytes()
    vmem_limit = max(32 * 1024 * 1024, min(int(cap * 0.6), 80 * 1024 * 1024))
    # v7x (64 MiB VMEM, 2 TCs): prefer the core-parallel tiled path earlier.
    fused_budget = (8 if cap <= 64 * 1024 * 1024 else 24) * 1024 * 1024
    return vmem_limit, fused_budget


def _pick_tiles(n):
    """Adaptive (tm, tk, padded_n): power-of-two multiples of 256, padding
    overhead bounded to ~25% beyond 256-alignment."""
    base = _round_up(max(n, 256), 256)
    limit = base + base // 4

    def pick(target):
        t = 256
        while t * 2 <= target and _round_up(max(n, 256), t * 2) <= limit:
            t *= 2
        return t

    tm = pick(_TM_TARGET)
    tk = pick(_TK_TARGET)
    np_ = _round_up(max(n, 256), max(tm, tk))   # tm, tk both divide np_
    return tm, tk, np_


# ----------------------------------------------------------------------------
# Fused kernel: ALL layers in one pallas_call, grid = (nr_layers,).
#   a_ref  : [Np, Np] bf16   normalized adjacency (constant block -> resident)
#   x0_ref : [Np, Dp] bf16   input node features (resident)
#   rs_ref : [Np, 1]  f32    rowsum(A_hat), precomputed (resident)
#   w_ref  : [1, Dp, Dp] bf16 per-layer W^T
#   b_ref  : [1, 1, Dp]  f32  per-layer bias
#   o_ref  : [Np, Dp] f32    final-layer output
#   xbuf   : VMEM [Np, Dp] bf16  layer-to-layer feature carry
# ----------------------------------------------------------------------------
def _gcn_fused_kernel(a_ref, x0_ref, rs_ref, w_ref, b_ref, o_ref, xbuf_ref):
    layer = pl.program_id(0)

    @pl.when(layer == 0)
    def _init():
        xbuf_ref[...] = x0_ref[...]

    # agg = A_hat @ x          (bf16 x bf16 -> f32 accumulate on the MXU)
    agg = jnp.dot(a_ref[...], xbuf_ref[...], preferred_element_type=jnp.float32)
    # out = relu(agg @ W^T + rowsum(A_hat) * b)  ==  relu(A_hat @ (x W^T + b))
    h = jnp.dot(agg.astype(jnp.bfloat16), w_ref[0],
                preferred_element_type=jnp.float32)
    out = jnp.maximum(h + rs_ref[...] * b_ref[0], 0.0)
    # NOTE: bf16 carry; error compounds with layer count (fine for shallow nets).
    xbuf_ref[...] = out.astype(xbuf_ref.dtype)

    @pl.when(layer == pl.num_programs(0) - 1)
    def _finalize():
        o_ref[...] = out.astype(o_ref.dtype)


def _gcn_fused_call(a_p, x_p, rs_p, w_stack, b_stack, vmem_limit):
    np_, dp = x_p.shape
    nl = w_stack.shape[0]
    return pl.pallas_call(
        _gcn_fused_kernel,
        out_shape=jax.ShapeDtypeStruct((np_, dp), jnp.float32),
        grid_spec=pltpu.PrefetchScalarGridSpec(
            num_scalar_prefetch=0,
            grid=(nl,),
            in_specs=[
                pl.BlockSpec((np_, np_), lambda l: (0, 0)),      # A_hat, resident
                pl.BlockSpec((np_, dp), lambda l: (0, 0)),       # x0, resident
                pl.BlockSpec((np_, 1), lambda l: (0, 0)),        # rowsum, resident
                pl.BlockSpec((1, dp, dp), lambda l: (l, 0, 0)),  # W_l^T (bf16)
                pl.BlockSpec((1, 1, dp), lambda l: (l, 0, 0)),   # b_l
            ],
            out_specs=pl.BlockSpec((np_, dp), lambda l: (0, 0)),
            scratch_shapes=[
                pltpu.VMEM((np_, dp), jnp.bfloat16),   # layer-to-layer x carry
            ],
        ),
        compiler_params=pltpu.CompilerParams(
            dimension_semantics=("arbitrary",),        # layers are sequential
            vmem_limit_bytes=vmem_limit,
        ),
    )(a_p, x_p, rs_p, w_stack, b_stack)


# ----------------------------------------------------------------------------
# Tiled kernel: ONE layer, grid = (Np // TM, Np // TK).
#   a_ref : [TM, TK] bf16      A_hat tile
#   x_ref : [Np, Dp] bf16 (resident) or [TK, Dp] bf16 (streamed)
#   w_ref : [Dp, Dp] bf16      W^T (resident)
#   b_ref : [1, Dp]  f32       bias (resident)
#   rs_ref: [TM, 1]  f32       precomputed rowsum(A_hat) rows
#   o_ref : [TM, Dp] out_dtype output row tile (bf16 intermediate / f32 last)
#   acc   : VMEM [TM, Dp] f32  accumulator for A_hat @ x over the K axis
# ----------------------------------------------------------------------------
def _gcn_layer_tiled_kernel(a_ref, x_ref, w_ref, b_ref, rs_ref, o_ref, acc_ref,
                            *, tk, x_resident):
    k = pl.program_id(1)

    @pl.when(k == 0)
    def _init():
        acc_ref[...] = jnp.zeros_like(acc_ref)

    if x_resident:
        start = pl.multiple_of(k * tk, tk)
        x_blk = x_ref[pl.ds(start, tk), :]
    else:
        x_blk = x_ref[...]

    acc_ref[...] += jnp.dot(a_ref[...], x_blk, preferred_element_type=jnp.float32)

    @pl.when(k == pl.num_programs(1) - 1)
    def _finalize():
        h = jnp.dot(acc_ref[...].astype(jnp.bfloat16), w_ref[...],
                    preferred_element_type=jnp.float32)
        o_ref[...] = jnp.maximum(h + rs_ref[...] * b_ref[...], 0.0).astype(o_ref.dtype)


def _gcn_layer_tiled_call(a_p, x_p, rs_p, w_l, b_l, *, tm, tk, out_dtype,
                          x_resident, vmem_limit):
    nrows, nk = a_p.shape
    dp = x_p.shape[1]
    grid = (nrows // tm, nk // tk)

    if x_resident:
        x_spec = pl.BlockSpec((nk, dp), lambda i, k: (0, 0))     # VMEM-resident x
    else:
        x_spec = pl.BlockSpec((tk, dp), lambda i, k: (k, 0))     # streamed per K tile

    kernel = functools.partial(_gcn_layer_tiled_kernel, tk=tk, x_resident=x_resident)

    return pl.pallas_call(
        kernel,
        out_shape=jax.ShapeDtypeStruct((nrows, dp), out_dtype),
        grid_spec=pltpu.PrefetchScalarGridSpec(
            num_scalar_prefetch=0,
            grid=grid,
            in_specs=[
                pl.BlockSpec((tm, tk), lambda i, k: (i, k)),     # A_hat tile
                x_spec,
                pl.BlockSpec((dp, dp), lambda i, k: (0, 0)),     # W^T bf16, resident
                pl.BlockSpec((1, dp), lambda i, k: (0, 0)),      # bias, resident
                pl.BlockSpec((tm, 1), lambda i, k: (i, 0)),      # rowsum rows
            ],
            out_specs=pl.BlockSpec((tm, dp), lambda i, k: (i, 0)),
            scratch_shapes=[
                pltpu.VMEM((tm, dp), jnp.float32),
            ],
        ),
        compiler_params=pltpu.CompilerParams(
            dimension_semantics=("parallel", "arbitrary"),  # rows across cores, K is reduction
            vmem_limit_bytes=vmem_limit,
        ),
    )(a_p, x_p, w_l, b_l, rs_p)


# ----------------------------------------------------------------------------
# Glue: add_remaining_self_loops + degree normalization -> dense A_hat.
# Matches the spec's GCNConvLayer exactly: deg = degree(col) is an UNWEIGHTED
# edge count (including the appended self loops); existing self loops keep
# their weight. (PyG's gcn_norm would use a weighted degree — the spec doesn't.)
#   edge_index  : int32 [2, E]   (row = source, col = target)
#   edge_weight : float [E, 1]
# ----------------------------------------------------------------------------
def build_normalized_adjacency(edge_index, edge_weight, num_nodes, dtype=jnp.float32):
    row = edge_index[0]
    col = edge_index[1]
    ew = edge_weight.reshape(-1).astype(dtype)

    # add_remaining_self_loops: self loops (weight 1) only for nodes lacking one.
    is_self = (row == col)
    has_self = (
        jnp.zeros((num_nodes,), dtype).at[row].add(jnp.where(is_self, 1.0, 0.0)) > 0
    )

    # deg = degree(col): unweighted edge count per target, incl. appended self loops.
    deg = jnp.zeros((num_nodes,), dtype).at[col].add(jnp.ones_like(ew))
    deg = deg + jnp.where(has_self, jnp.zeros((), dtype), jnp.ones((), dtype))

    deg_inv_sqrt = jnp.where(deg > 0, jax.lax.rsqrt(deg), jnp.zeros_like(deg))

    # norm over original edges; aggregate at the target node (col).
    norm = deg_inv_sqrt[row] * ew * deg_inv_sqrt[col]
    a_hat = jnp.zeros((num_nodes, num_nodes), dtype).at[col, row].add(norm)

    # appended self loops (weight 1) only where missing.
    diag = jnp.where(has_self, jnp.zeros_like(deg), deg_inv_sqrt * deg_inv_sqrt)
    idx = jnp.arange(num_nodes)
    a_hat = a_hat.at[idx, idx].add(diag)
    return a_hat


def gcn_forward(x, edge_index, edge_weight, params, mode="auto", force_x_resident=None):
    """Full GCN forward: nr_layers x (GCNConvLayer -> ReLU)."""
    n, d = x.shape
    nl = len(params)
    a_hat = build_normalized_adjacency(edge_index, edge_weight, n, jnp.float32)
    # Layer-invariant rowsum(A_hat), computed once in f32 (no in-kernel upcast/reduce).
    rowsum = jnp.sum(a_hat, axis=1, keepdims=True)

    dp = _round_up(max(d, _LANE), _LANE)   # lane-dense feature dim
    vmem_limit, fused_budget = _budgets()

    if mode == "auto":
        np_f = _round_up(n, _LANE)
        a_bytes = np_f * np_f * 2          # A_hat is resident (constant index map)
        mode = "fused" if a_bytes <= fused_budget else "tiled"

    # Pre-transpose + zero-pad per-layer params (kernels compute h @ W^T).
    # W in bf16 (MXU-native), bias stays f32.
    w_stack = jnp.stack(
        [_pad2(w.T.astype(jnp.float32), dp, dp) for (w, _) in params]
    ).astype(jnp.bfloat16)
    b_stack = jnp.stack(
        [_pad2(b.astype(jnp.float32).reshape(1, -1), 1, dp) for (_, b) in params]
    )

    if mode == "fused":
        np_ = _round_up(n, _LANE)
        a_p = _pad2(a_hat, np_, np_).astype(jnp.bfloat16)
        x_p = _pad2(x.astype(jnp.float32), np_, dp).astype(jnp.bfloat16)
        rs_p = _pad2(rowsum, np_, 1)
        out = _gcn_fused_call(a_p, x_p, rs_p, w_stack, b_stack, vmem_limit)
    elif mode == "tiled":
        tm, tk, np_ = _pick_tiles(n)
        a_p = _pad2(a_hat, np_, np_).astype(jnp.bfloat16)
        x_p = _pad2(x.astype(jnp.float32), np_, dp).astype(jnp.bfloat16)
        rs_p = _pad2(rowsum, np_, 1)
        x_resident = (np_ * dp * 2) <= max(8 * 1024 * 1024, vmem_limit // 3)
        if force_x_resident is not None:
            x_resident = bool(force_x_resident)
        out = None
        for li in range(nl):
            out_dtype = jnp.float32 if li == nl - 1 else jnp.bfloat16
            out = _gcn_layer_tiled_call(
                a_p, x_p, rs_p, w_stack[li], b_stack[li],
                tm=tm, tk=tk, out_dtype=out_dtype,
                x_resident=x_resident, vmem_limit=vmem_limit)
            if li < nl - 1:
                x_p = out                      # already bf16, no extra cast pass
    else:
        raise ValueError(f"unknown mode: {mode}")

    return out[:n, :d]


# Pure-JAX f32 reference (same math, no Pallas) for a sanity check.
def gcn_forward_ref(x, edge_index, edge_weight, params):
    n = x.shape[0]
    a = build_normalized_adjacency(edge_index, edge_weight, n, jnp.float32)
    h = x.astype(jnp.float32)
    for (w, b) in params:
        lin = jnp.matmul(h, w.T, precision=jax.lax.Precision.HIGHEST) + b[None, :]
        h = jnp.maximum(jnp.matmul(a, lin, precision=jax.lax.Precision.HIGHEST), 0.0)
    return h


def _rel_err(a, b):
    return float(jnp.linalg.norm(a - b) / (jnp.linalg.norm(b) + 1e-12))


def _make_graph(key, n, e, dim):
    k_x, k_src, k_dst, k_w = jax.random.split(key, 4)
    x = jax.random.normal(k_x, (n, dim), dtype=jnp.float32)
    src = jax.random.randint(k_src, (e,), 0, n, dtype=jnp.int32)
    # avoid accidental self loops so add_remaining_self_loops adds all of them
    dst = (src + 1 + jax.random.randint(k_dst, (e,), 0, n - 1, dtype=jnp.int32)) % n
    edge_index = jnp.stack([src, dst], axis=0)                         # [2, E]
    edge_weight = jax.random.uniform(k_w, (e, 1), dtype=jnp.float32,
                                     minval=0.5, maxval=1.5)           # [E, 1]
    return x, edge_index, edge_weight


def _make_params(key, dim, nr_layers):
    params = []
    for _ in range(nr_layers):
        key, kw, kb = jax.random.split(key, 3)
        w = jax.random.normal(kw, (dim, dim), dtype=jnp.float32) / jnp.sqrt(float(dim))
        b = jax.random.normal(kb, (dim,), dtype=jnp.float32) * 0.1
        params.append((w, b))
    return params


if __name__ == "__main__":
    key = jax.random.PRNGKey(0)
    k1, k2, k3, kp1, kp2, kp3 = jax.random.split(key, 6)

    # ---- test 1: small graph (auto -> fused single-call multi-layer kernel) ----
    N, DIM, E, NR_LAYERS = 16, 32, 24, 2
    x, edge_index, edge_weight = _make_graph(k1, N, E, DIM)
    params = _make_params(kp1, DIM, NR_LAYERS)

    out = jax.block_until_ready(gcn_forward(x, edge_index, edge_weight, params))
    ref = gcn_forward_ref(x, edge_index, edge_weight, params)
    assert out.shape == (N, DIM)
    assert _rel_err(out, ref) < 3e-2, "fused path mismatch vs reference (small)"

    # ---- test 2: mid graph, tiled path (resident + streamed x) vs fused vs ref ----
    N2, E2, L2 = 300, 1200, 2
    x2, ei2, ew2 = _make_graph(k2, N2, E2, DIM)
    params2 = _make_params(kp2, DIM, L2)

    out_tr = jax.block_until_ready(
        gcn_forward(x2, ei2, ew2, params2, mode="tiled", force_x_resident=True))
    out_ts = jax.block_until_ready(
        gcn_forward(x2, ei2, ew2, params2, mode="tiled", force_x_resident=False))
    out_f = jax.block_until_ready(gcn_forward(x2, ei2, ew2, params2, mode="fused"))
    ref2 = gcn_forward_ref(x2, ei2, ew2, params2)
    assert out_tr.shape == (N2, DIM) and out_f.shape == (N2, DIM)
    assert _rel_err(out_tr, ref2) < 3e-2, "tiled (resident x) mismatch vs reference"
    assert _rel_err(out_ts, ref2) < 3e-2, "tiled (streamed x) mismatch vs reference"
    assert _rel_err(out_f, ref2) < 3e-2, "fused path mismatch vs reference (mid)"
    assert _rel_err(out_tr, out_f) < 1e-2, "tiled vs fused path mismatch"

    # ---- test 3: larger graph, exercises multi-tile K accumulation in tiled path ----
    N3, E3, L3 = 1200, 4800, 2
    x3, ei3, ew3 = _make_graph(k3, N3, E3, DIM)
    params3 = _make_params(kp3, DIM, L3)

    out3 = jax.block_until_ready(gcn_forward(x3, ei3, ew3, params3, mode="tiled"))
    ref3 = gcn_forward_ref(x3, ei3, ew3, params3)
    assert out3.shape == (N3, DIM)
    assert _rel_err(out3, ref3) < 3e-2, "tiled path mismatch vs reference (large)"

    print("KERNEL_OK")
</pallas_src>

<mosaic_0001>
module attributes {stable_mosaic.version = 11 : i64} {
  func.func @_gcn_fused_kernel(%arg0: i32, %arg1: memref<128x128xbf16, #tpu.memory_space<vmem>>, %arg2: memref<128x128xbf16, #tpu.memory_space<vmem>>, %arg3: memref<128x1xf32, #tpu.memory_space<vmem>>, %arg4: memref<1x128x128xbf16, #tpu.memory_space<vmem>>, %arg5: memref<1x1x128xf32, #tpu.memory_space<vmem>>, %arg6: memref<128x128xf32, #tpu.memory_space<vmem>>, %arg7: memref<128x128xbf16, #tpu.memory_space<vmem>>) attributes {dimension_semantics = [#tpu.dimension_semantics<arbitrary>], iteration_bounds = array<i64: 2>, scalar_prefetch = 0 : i64, scratch_operands = 1 : i64, tpu.core_type = #tpu.core_type<tc>, window_params = [{pipeline_mode = #tpu.pipeline_mode<synchronous>, transform_indices = @transform_0, window_bounds = array<i64: 128, 128>}, {pipeline_mode = #tpu.pipeline_mode<synchronous>, transform_indices = @transform_1, window_bounds = array<i64: 128, 128>}, {pipeline_mode = #tpu.pipeline_mode<synchronous>, transform_indices = @transform_2, window_bounds = array<i64: 128, 1>}, {transform_indices = @transform_3, window_bounds = array<i64: 1, 128, 128>}, {transform_indices = @transform_4, window_bounds = array<i64: 1, 1, 128>}, {pipeline_mode = #tpu.pipeline_mode<synchronous>, transform_indices = @transform_5, window_bounds = array<i64: 128, 128>}]} {
    %c0_i32 = arith.constant 0 : i32
    %0 = arith.cmpi eq, %arg0, %c0_i32 : i32
    %1 = arith.extui %0 : i1 to i32
    %c0_i32_0 = arith.constant 0 : i32
    %2 = arith.cmpi ne, %1, %c0_i32_0 : i32
    scf.if %2 {
      %c0_17 = arith.constant 0 : index
      %c0_18 = arith.constant 0 : index
      %24 = vector.load %arg2[%c0_17, %c0_18] : memref<128x128xbf16, #tpu.memory_space<vmem>>, vector<128x128xbf16>
      %c0_19 = arith.constant 0 : index
      %c0_20 = arith.constant 0 : index
      %25 = vector.load %arg7[%c0_19, %c0_20] : memref<128x128xbf16, #tpu.memory_space<vmem>>, vector<128x128xbf16>
      tpu.vector_store %arg7[%c0_19, %c0_20], %24 {strides = array<i32>} : memref<128x128xbf16, #tpu.memory_space<vmem>>, vector<128x128xbf16>,
    } else {
    }
    %c0 = arith.constant 0 : index
    %c0_1 = arith.constant 0 : index
    %3 = vector.load %arg1[%c0, %c0_1] : memref<128x128xbf16, #tpu.memory_space<vmem>>, vector<128x128xbf16>
    %c0_2 = arith.constant 0 : index
    %c0_3 = arith.constant 0 : index
    %4 = vector.load %arg7[%c0_2, %c0_3] : memref<128x128xbf16, #tpu.memory_space<vmem>>, vector<128x128xbf16>
    %cst = arith.constant dense<0.000000e+00> : vector<128x128xf32>
    %5 = tpu.matmul %3, %4, %cst {dimension_numbers = #tpu.dot_dimension_numbers<[1], [0], [0], [1], [0, 0, 1, 1], [], []>} : vector<128x128xbf16>, vector<128x128xbf16>, vector<128x128xf32> -> vector<128x128xf32>
    %6 = arith.truncf %5 : vector<128x128xf32> to vector<128x128xbf16>
    %c0_4 = arith.constant 0 : index
    %c0_5 = arith.constant 0 : index
    %c0_6 = arith.constant 0 : index
    %7 = vector.load %arg4[%c0_4, %c0_5, %c0_6] : memref<1x128x128xbf16, #tpu.memory_space<vmem>>, vector<1x128x128xbf16>
    %8 = vector.shape_cast %7 : vector<1x128x128xbf16> to vector<128x128xbf16>
    %cst_7 = arith.constant dense<0.000000e+00> : vector<128x128xf32>
    %9 = tpu.matmul %6, %8, %cst_7 {dimension_numbers = #tpu.dot_dimension_numbers<[1], [0], [0], [1], [0, 0, 1, 1], [], []>} : vector<128x128xbf16>, vector<128x128xbf16>, vector<128x128xf32> -> vector<128x128xf32>
    %c0_8 = arith.constant 0 : index
    %c0_9 = arith.constant 0 : index
    %10 = vector.load %arg3[%c0_8, %c0_9] : memref<128x1xf32, #tpu.memory_space<vmem>>, vector<128x1xf32>
    %c0_10 = arith.constant 0 : index
    %c0_11 = arith.constant 0 : index
    %c0_12 = arith.constant 0 : index
    %11 = vector.load %arg5[%c0_10, %c0_11, %c0_12] : memref<1x1x128xf32, #tpu.memory_space<vmem>>, vector<1x1x128xf32>
    %12 = vector.shape_cast %11 : vector<1x1x128xf32> to vector<1x128xf32>
    %13 = vector.broadcast %10 : vector<128x1xf32> to vector<128x128xf32>
    %14 = vector.broadcast %12 : vector<1x128xf32> to vector<128x128xf32>
    %15 = arith.mulf %13, %14 : vector<128x128xf32>
    %16 = arith.addf %9, %15 : vector<128x128xf32>
    %cst_13 = arith.constant 0.000000e+00 : f32
    %17 = vector.broadcast %cst_13 : f32 to vector<128x128xf32>
    %18 = arith.maximumf %16, %17 : vector<128x128xf32>
    %19 = arith.truncf %18 : vector<128x128xf32> to vector<128x128xbf16>
    %c0_14 = arith.constant 0 : index
    %c0_15 = arith.constant 0 : index
    %20 = vector.load %arg7[%c0_14, %c0_15] : memref<128x128xbf16, #tpu.memory_space<vmem>>, vector<128x128xbf16>
    tpu.vector_store %arg7[%c0_14, %c0_15], %19 {strides = array<i32>} : memref<128x128xbf16, #tpu.memory_space<vmem>>, vector<128x128xbf16>,
    %c1_i32 = arith.constant 1 : i32
    %21 = arith.cmpi eq, %arg0, %c1_i32 : i32
    %22 = arith.extui %21 : i1 to i32
    %c0_i32_16 = arith.constant 0 : i32
    %23 = arith.cmpi ne, %22, %c0_i32_16 : i32
    scf.if %23 {
      %c0_17 = arith.constant 0 : index
      %c0_18 = arith.constant 0 : index
      %24 = vector.load %arg6[%c0_17, %c0_18] : memref<128x128xf32, #tpu.memory_space<vmem>>, vector<128x128xf32>
      tpu.vector_store %arg6[%c0_17, %c0_18], %18 {strides = array<i32>} : memref<128x128xf32, #tpu.memory_space<vmem>>, vector<128x128xf32>,
    } else {
    }
    return
  }
  func.func @transform_0(%arg0: i32) -> (i32, i32) {
    %c0_i32 = arith.constant 0 : i32
    %c0_i32_0 = arith.constant 0 : i32
    %c0_i32_1 = arith.constant 0 : i32
    return %c0_i32, %c0_i32_0 : i32, i32
  }
  func.func @transform_1(%arg0: i32) -> (i32, i32) {
    %c0_i32 = arith.constant 0 : i32
    %c0_i32_0 = arith.constant 0 : i32
    %c0_i32_1 = arith.constant 0 : i32
    return %c0_i32, %c0_i32_0 : i32, i32
  }
  func.func @transform_2(%arg0: i32) -> (i32, i32) {
    %c0_i32 = arith.constant 0 : i32
    %c0_i32_0 = arith.constant 0 : i32
    %c0_i32_1 = arith.constant 0 : i32
    return %c0_i32, %c0_i32_0 : i32, i32
  }
  func.func @transform_3(%arg0: i32) -> (i32, i32, i32) {
    %c0_i32 = arith.constant 0 : i32
    %c0_i32_0 = arith.constant 0 : i32
    %c0_i32_1 = arith.constant 0 : i32
    return %arg0, %c0_i32, %c0_i32_0 : i32, i32, i32
  }
  func.func @transform_4(%arg0: i32) -> (i32, i32, i32) {
    %c0_i32 = arith.constant 0 : i32
    %c0_i32_0 = arith.constant 0 : i32
    %c0_i32_1 = arith.constant 0 : i32
    return %arg0, %c0_i32, %c0_i32_0 : i32, i32, i32
  }
  func.func @transform_5(%arg0: i32) -> (i32, i32) {
    %c0_i32 = arith.constant 0 : i32
    %c0_i32_0 = arith.constant 0 : i32
    %c0_i32_1 = arith.constant 0 : i32
    return %c0_i32, %c0_i32_0 : i32, i32
  }
}

</mosaic_0001>

<llo_original>
// kernel: tpu_custom_call.1
$region0: #{tpu_custom_call.1}
  #allocation0 [shape = 'u32[]', space=smem, size = 0x4, offset = 0x4, fixed_abs, tag = 'smem constant byte address 0x4 - core index']
  #allocation1 [shape = 'u32[144,128]{1,0:T(1,128)}', space=vmem, size = 0x12000, scoped, tag = 'internal scratch']
  #allocation2 [shape = 'bf16[128,128]{1,0:T(8,128)(2,1)}', space=vmem, size = 0x8000, scoped, tag = 'scratch operand']
  %s0 = inlined_call_operand.hbm [shape: bf16[128,128], index: 0, kind: input, shape index: {}]
  %s1 = inlined_call_operand.hbm [shape: bf16[128,128], index: 1, kind: input, shape index: {}]
  %s2 = inlined_call_operand.vmem [shape: f32[128,1], index: 2, kind: input, shape index: {}]
  %s3 = inlined_call_operand.vmem [shape: bf16[2,128,128], index: 3, kind: input, shape index: {}]
  %s4 = inlined_call_operand.vmem [shape: f32[2,1,128], index: 4, kind: input, shape index: {}]
  %s5 = inlined_call_operand.hbm [shape: f32[128,128], index: 5, kind: output, shape index: {}]
  %s6 = sld [smem:[#allocation0]]
  $region69: #{tpu_custom_call.1} parent=0
    _
  %s8 = ssub.s32 1, %s6
  %s9 = scalar_select 0, %s8, %s6
  $region1: #{tpu_custom_call.1} parent=0
    #allocation3 [shape = 'u8[32768]{0}', space=vmem, size = 0x8000, scoped, tag = 'input window, operand 0, single buffered']
    #allocation4 [shape = 's32[2]{0}', space=sflag, size = 0x8, scoped, tag = 'scoped memory for tpu_custom_call.1']
    #allocation5 [shape = 's32[2]{0}', space=sflag, size = 0x8, scoped, tag = 'scoped memory for tpu_custom_call.1']
    #allocation6 [shape = 'u8[32768]{0}', space=vmem, size = 0x8000, scoped, tag = 'input window, operand 1, single buffered']
    #allocation7 [shape = 's32[1]{0}', space=sflag, size = 0x4, scoped, tag = 'scoped memory for tpu_custom_call.1']
    #allocation8 [shape = 'u8[65536]{0}', space=vmem, size = 0x10000, scoped, tag = 'output window, operand 0, single buffered']
    %10 = vsyncpa [#allocation4], 0
    %11 = vsyncpa [#allocation7], 0
    %12 = vsyncpa [#allocation5], 0
    loop: start=0, step=1, limit=4
    $region2: #{tpu_custom_call.1} parent=1 // loop_pre_header
      _
    $region3: #{tpu_custom_call.1} parent=1 // loop_header
      %s14 = sphi 0, %s18
      %p15 = scmp.ge.s32.totalorder %s14, 4
      %s22 = sphi 0, %s22
      %s24 = sphi 0, %s22
      %s25 = sphi 0, %s24
      %s39 = sphi 0, %s25
      %s43 = sphi 0, %s43
      %s45 = sphi 0, %s43
      %s46 = sphi 0, %s45
      %s60 = sphi 0, %s46
      %s64 = sphi 0, %s64
      %s66 = sphi 0, %s64
      %s67 = sphi 0, %s66
      %s81 = sphi 0, %s67
      %s87 = sphi 0, %s89
      %s90 = sphi 0, %s87
      %s91 = sphi 0, %s90
      %s107 = sphi 0, %s91
      %s113 = sphi 0, %s115
      %s116 = sphi 0, %s113
      %s117 = sphi 0, %s116
      %s133 = sphi 0, %s117
      %s137 = sphi 0, %s137
      %s139 = sphi 0, %s137
      %s140 = sphi 0, %s139
      %s154 = sphi 0, %s140
    $region4: #{tpu_custom_call.1} parent=1 // loop_header_branch
      %17 = sbr.rel (%p15) target = $region8
    $region5: #{tpu_custom_call.1} parent=1 // loop_body
      %s19 = ssub.s32 %s14, 1
      %s20 = ssub.s32 %s14, 2
      %s21 = sadd.s32 %s14, 1
      %s23 = sadd.s32 %s22, 1
      %p26 = scmp.eq.s32.totalorder %s14, 1
      %p27 = scmp.ne.s32.totalorder %s22, %s24
      %p28 = scmp.eq.s32.totalorder %s14, 0
      %p29 = por %p27, %p28
      %p30 = scmp.ne.s32.totalorder %s22, %s24
      %p31 = scmp.eq.s32.totalorder %s19, 1
      %p32 = por %p30, %p31
      %p33 = scmp.ne.s32.totalorder %s24, %s25
      %p34 = scmp.eq.s32.totalorder %s19, 0
      %p35 = por %p33, %p34
      %p36 = scmp.ne.s32.totalorder %s24, %s25
      %p37 = scmp.eq.s32.totalorder %s20, 1
      %p38 = por %p36, %p37
      %p40 = scmp.ne.s32.totalorder %s25, %s39
      %p41 = scmp.eq.s32.totalorder %s20, 0
      %p42 = por %p40, %p41
      %s44 = sadd.s32 %s43, 1
      %p47 = scmp.eq.s32.totalorder %s14, 1
      %p48 = scmp.ne.s32.totalorder %s43, %s45
      %p49 = scmp.eq.s32.totalorder %s14, 0
      %p50 = por %p48, %p49
      %p51 = scmp.ne.s32.totalorder %s43, %s45
      %p52 = scmp.eq.s32.totalorder %s19, 1
      %p53 = por %p51, %p52
      %p54 = scmp.ne.s32.totalorder %s45, %s46
      %p55 = scmp.eq.s32.totalorder %s19, 0
      %p56 = por %p54, %p55
      %p57 = scmp.ne.s32.totalorder %s45, %s46
      %p58 = scmp.eq.s32.totalorder %s20, 1
      %p59 = por %p57, %p58
      %p61 = scmp.ne.s32.totalorder %s46, %s60
      %p62 = scmp.eq.s32.totalorder %s20, 0
      %p63 = por %p61, %p62
      %s65 = sadd.s32 %s64, 1
      %p68 = scmp.eq.s32.totalorder %s14, 1
      %p69 = scmp.ne.s32.totalorder %s64, %s66
      %p70 = scmp.eq.s32.totalorder %s14, 0
      %p71 = por %p69, %p70
      %p72 = scmp.ne.s32.totalorder %s64, %s66
      %p73 = scmp.eq.s32.totalorder %s19, 1
      %p74 = por %p72, %p73
      %p75 = scmp.ne.s32.totalorder %s66, %s67
      %p76 = scmp.eq.s32.totalorder %s19, 0
      %p77 = por %p75, %p76
      %p78 = scmp.ne.s32.totalorder %s66, %s67
      %p79 = scmp.eq.s32.totalorder %s20, 1
      %p80 = por %p78, %p79
      %p82 = scmp.ne.s32.totalorder %s67, %s81
      %p83 = scmp.eq.s32.totalorder %s20, 0
      %p84 = por %p82, %p83
      %s85 = ssub.s32 %s14, %s21
      %p86 = scmp.eq.s32.totalorder %s85, 0
      %s88 = sadd.s32 %s87, 1
      %s89 = scalar_select %p86, %s87, %s88
      %p92 = pneg %p86
      %p93 = scmp.eq.s32.totalorder %s14, 1
      %p94 = por %p92, %p93
      %p95 = scmp.ne.s32.totalorder %s87, %s90
      %p96 = scmp.eq.s32.totalorder %s14, 0
      %p97 = por %p95, %p96
      %p98 = scmp.ne.s32.totalorder %s87, %s90
      %p99 = scmp.eq.s32.totalorder %s19, 1
      %p100 = por %p98, %p99
      %p101 = scmp.ne.s32.totalorder %s90, %s91
      %p102 = scmp.eq.s32.totalorder %s19, 0
      %p103 = por %p101, %p102
      %p104 = scmp.ne.s32.totalorder %s90, %s91
      %p105 = scmp.eq.s32.totalorder %s20, 1
      %p106 = por %p104, %p105
      %p108 = scmp.ne.s32.totalorder %s91, %s107
      %p109 = scmp.eq.s32.totalorder %s20, 0
      %p110 = por %p108, %p109
      %s111 = ssub.s32 %s14, %s21
      %p112 = scmp.eq.s32.totalorder %s111, 0
      %s114 = sadd.s32 %s113, 1
      %s115 = scalar_select %p112, %s113, %s114
      %p118 = pneg %p112
      %p119 = scmp.eq.s32.totalorder %s14, 1
      %p120 = por %p118, %p119
      %p121 = scmp.ne.s32.totalorder %s113, %s116
      %p122 = scmp.eq.s32.totalorder %s14, 0
      %p123 = por %p121, %p122
      %p124 = scmp.ne.s32.totalorder %s113, %s116
      %p125 = scmp.eq.s32.totalorder %s19, 1
      %p126 = por %p124, %p125
      %p127 = scmp.ne.s32.totalorder %s116, %s117
      %p128 = scmp.eq.s32.totalorder %s19, 0
      %p129 = por %p127, %p128
      %p130 = scmp.ne.s32.totalorder %s116, %s117
      %p131 = scmp.eq.s32.totalorder %s20, 1
      %p132 = por %p130, %p131
      %p134 = scmp.ne.s32.totalorder %s117, %s133
      %p135 = scmp.eq.s32.totalorder %s20, 0
      %p136 = por %p134, %p135
      %s138 = sadd.s32 %s137, 1
      %p141 = scmp.eq.s32.totalorder %s14, 1
      %p142 = scmp.ne.s32.totalorder %s137, %s139
      %p143 = scmp.eq.s32.totalorder %s14, 0
      %p144 = por %p142, %p143
      %p145 = scmp.ne.s32.totalorder %s137, %s139
      %p146 = scmp.eq.s32.totalorder %s19, 1
      %p147 = por %p145, %p146
      %p148 = scmp.ne.s32.totalorder %s139, %s140
      %p149 = scmp.eq.s32.totalorder %s19, 0
      %p150 = por %p148, %p149
      %p151 = scmp.ne.s32.totalorder %s139, %s140
      %p152 = scmp.eq.s32.totalorder %s20, 1
      %p153 = por %p151, %p152
      %p155 = scmp.ne.s32.totalorder %s140, %s154
      %p156 = scmp.eq.s32.totalorder %s20, 0
      %p157 = por %p155, %p156
      %p158 = scmp.le.s32.totalorder 1, %s14
      %p159 = scmp.lt.s32.totalorder %s14, 3
      %p160 = pnand %p158, %p159
      %p161 = pneg %p160
      // Predicated region
      $region9: #{tpu_custom_call.1} parent=5 // pred_check
        _
      $region10: #{tpu_custom_call.1} parent=5 // pred_check_branch
        %163 = sbr.rel (%p160) target = $region12
      $region11: #{tpu_custom_call.1} parent=5 // pred_region
        %s164 = ssub.s32 %s14, 1
        // Predicated region
        $region13: #{tpu_custom_call.1} parent=11 // pred_check
          %p165 = pneg %p35
        $region14: #{tpu_custom_call.1} parent=11 // pred_check_branch
          %167 = sbr.rel (%p165) target = $region16
        $region15: #{tpu_custom_call.1} parent=11 // pred_region
          %s169 = ssub.s32 1024, 1024
          %170 = vsyncadd [#allocation4], %s169
          %s171 = sshll.u32 [#allocation3], 4
          %s172 = int_to_ptr.vmem [resolvable:$true] %s171
          %177 = dma.hbm_to_vmem [thread:$0]  %s0, 1024, %s172, [#allocation4], 64, 64, 4
        $region16: #{tpu_custom_call.1} parent=11 // pred_fallthru
          _
        // Predicated region
        $region17: #{tpu_custom_call.1} parent=11 // pred_check
          %p178 = pneg %p56
        $region18: #{tpu_custom_call.1} parent=11 // pred_check_branch
          %180 = sbr.rel (%p178) target = $region20
        $region19: #{tpu_custom_call.1} parent=11 // pred_region
          %s182 = ssub.s32 1024, 1024
          %183 = vsyncadd [#allocation7], %s182
          %s184 = sshll.u32 [#allocation6], 4
          %s185 = int_to_ptr.vmem [resolvable:$true] %s184
          %190 = dma.hbm_to_vmem [thread:$0]  %s1, 1024, %s185, [#allocation7], 64, 64, 4
        $region20: #{tpu_custom_call.1} parent=11 // pred_fallthru
          _
        // Predicated region
        $region21: #{tpu_custom_call.1} parent=11 // pred_check
          %p191 = pneg %p77
        $region22: #{tpu_custom_call.1} parent=11 // pred_check_branch
          %193 = sbr.rel (%p191) target = $region24
        $region23: #{tpu_custom_call.1} parent=11 // pred_region
          _
        $region24: #{tpu_custom_call.1} parent=11 // pred_fallthru
          _
      $region12: #{tpu_custom_call.1} parent=5 // pred_fallthru
        _
      %p194 = scmp.lt.s32.totalorder %s14, 2
      // Predicated region
      $region25: #{tpu_custom_call.1} parent=5 // pred_check
        %p195 = pneg %p194
      $region26: #{tpu_custom_call.1} parent=5 // pred_check_branch
        %197 = sbr.rel (%p195) target = $region28
      $region27: #{tpu_custom_call.1} parent=5 // pred_region
        // Predicated region
        $region29: #{tpu_custom_call.1} parent=27 // pred_check
          %p198 = pneg %p97
        $region30: #{tpu_custom_call.1} parent=27 // pred_check_branch
          %200 = sbr.rel (%p198) target = $region32
        $region31: #{tpu_custom_call.1} parent=27 // pred_region
          %p201 = scmp.lt.s32.totalorder %s14, 1
          %s202 = scalar_select %p201, %s14, 1
          %s203 = smul.addr %s202, 16
          %s204 = smul.addr %s203, 4
          %s205 = scalar_lea.vmem %s3, %s204
        $region32: #{tpu_custom_call.1} parent=27 // pred_fallthru
          _
        // Predicated region
        $region33: #{tpu_custom_call.1} parent=27 // pred_check
          %p206 = pneg %p123
        $region34: #{tpu_custom_call.1} parent=27 // pred_check_branch
          %208 = sbr.rel (%p206) target = $region36
        $region35: #{tpu_custom_call.1} parent=27 // pred_region
          %p209 = scmp.lt.s32.totalorder %s14, 1
          %s210 = scalar_select %p209, %s14, 1
          %s211 = scalar_lea.vmem %s4, %s210
        $region36: #{tpu_custom_call.1} parent=27 // pred_fallthru
          _
      $region28: #{tpu_custom_call.1} parent=5 // pred_fallthru
        _
      %p212 = scmp.le.s32.totalorder 1, %s14
      %p213 = scmp.lt.s32.totalorder %s14, 3
      %p214 = pnand %p212, %p213
      %p215 = pneg %p214
      // Predicated region
      $region37: #{tpu_custom_call.1} parent=5 // pred_check
        _
      $region38: #{tpu_custom_call.1} parent=5 // pred_check_branch
        %217 = sbr.rel (%p214) target = $region40
      $region39: #{tpu_custom_call.1} parent=5 // pred_region
        %s218 = ssub.s32 %s14, 1
        // Predicated region
        $region41: #{tpu_custom_call.1} parent=39 // pred_check
          %p219 = pneg %p35
        $region42: #{tpu_custom_call.1} parent=39 // pred_check_branch
          %221 = sbr.rel (%p219) target = $region44
        $region43: #{tpu_custom_call.1} parent=39 // pred_region
          %222 = dma.done [#allocation4], 1024
        $region44: #{tpu_custom_call.1} parent=39 // pred_fallthru
          _
        // Predicated region
        $region45: #{tpu_custom_call.1} parent=39 // pred_check
          %p223 = pneg %p56
        $region46: #{tpu_custom_call.1} parent=39 // pred_check_branch
          %225 = sbr.rel (%p223) target = $region48
        $region47: #{tpu_custom_call.1} parent=39 // pred_region
          %226 = dma.done [#allocation7], 1024
        $region48: #{tpu_custom_call.1} parent=39 // pred_fallthru
          _
        %p227 = pneg %p35
        %p228 = pneg %p32
        %p229 = pneg %p56
        %p230 = pneg %p53
        %p231 = pneg %p77
        %p232 = pneg %p74
        %p233 = scmp.lt.s32.totalorder %s19, 1
        %s234 = scalar_select %p233, %s19, 1
        %s235 = smul.addr %s234, 16
        %s236 = smul.addr %s235, 4
        %s237 = scalar_lea.vmem %s3, %s236
        %p238 = pneg %p103
        %p239 = pneg %p100
        %p240 = scmp.lt.s32.totalorder %s19, 1
        %s241 = scalar_select %p240, %s19, 1
        %s242 = scalar_lea.vmem %s4, %s241
        %p243 = pneg %p129
        %p244 = pneg %p126
        %p245 = pneg %p150
        %p246 = pneg %p147
        %p247 = scmp.lt.s32.totalorder %s19, 1
        %s248 = scalar_select %p247, %s19, 1
        %s249 = smul.addr %s248, 16
        %s250 = smul.addr %s249, 4
        %s251 = scalar_lea.vmem %s3, %s250
        %p252 = scmp.lt.s32.totalorder %s19, 1
        %s253 = scalar_select %p252, %s19, 1
        %s254 = scalar_lea.vmem %s4, %s253
        %p256 = scmp.eq.s32.totalorder %s19, 0
        // Predicated region
        $region49: #{tpu_custom_call.1} parent=39 // pred_check
          %p257 = pneg %p256
        $region50: #{tpu_custom_call.1} parent=39 // pred_check_branch
          %259 = sbr.rel (%p257) target = $region52
        $region51: #{tpu_custom_call.1} parent=39 // pred_region
          %v260 = vld [vmem:[#allocation6] sm:$0xf]
          %v261 = vld [vmem:[#allocation6 + $0x4] sm:$0xf]
          %v262 = vld [vmem:[#allocation6 + $0x8] sm:$0xf]
          %v263 = vld [vmem:[#allocation6 + $0xc] sm:$0xf]
          %v264 = vld [vmem:[#allocation6 + $0x10] sm:$0xf]
          %v265 = vld [vmem:[#allocation6 + $0x14] sm:$0xf]
          %v266 = vld [vmem:[#allocation6 + $0x18] sm:$0xf]
          %v267 = vld [vmem:[#allocation6 + $0x1c] sm:$0xf]
          %v268 = vld [vmem:[#allocation6 + $0x20] sm:$0xf]
          %v269 = vld [vmem:[#allocation6 + $0x24] sm:$0xf]
          %v270 = vld [vmem:[#allocation6 + $0x28] sm:$0xf]
          %v271 = vld [vmem:[#allocation6 + $0x2c] sm:$0xf]
          %v272 = vld [vmem:[#allocation6 + $0x30] sm:$0xf]
          %v273 = vld [vmem:[#allocation6 + $0x34] sm:$0xf]
          %v274 = vld [vmem:[#allocation6 + $0x38] sm:$0xf]
          %v275 = vld [vmem:[#allocation6 + $0x3c] sm:$0xf]
          %276 = vst [vmem:[#allocation2] sm:$0xf] %v260
          %277 = vst [vmem:[#allocation2 + $0x4] sm:$0xf] %v261
          %278 = vst [vmem:[#allocation2 + $0x8] sm:$0xf] %v262
          %279 = vst [vmem:[#allocation2 + $0xc] sm:$0xf] %v263
          %280 = vst [vmem:[#allocation2 + $0x10] sm:$0xf] %v264
          %281 = vst [vmem:[#allocation2 + $0x14] sm:$0xf] %v265
          %282 = vst [vmem:[#allocation2 + $0x18] sm:$0xf] %v266
          %283 = vst [vmem:[#allocation2 + $0x1c] sm:$0xf] %v267
          %284 = vst [vmem:[#allocation2 + $0x20] sm:$0xf] %v268
          %285 = vst [vmem:[#allocation2 + $0x24] sm:$0xf] %v269
          %286 = vst [vmem:[#allocation2 + $0x28] sm:$0xf] %v270
          %287 = vst [vmem:[#allocation2 + $0x2c] sm:$0xf] %v271
          %288 = vst [vmem:[#allocation2 + $0x30] sm:$0xf] %v272
          %289 = vst [vmem:[#allocation2 + $0x34] sm:$0xf] %v273
          %290 = vst [vmem:[#allocation2 + $0x38] sm:$0xf] %v274
          %291 = vst [vmem:[#allocation2 + $0x3c] sm:$0xf] %v275
        $region52: #{tpu_custom_call.1} parent=39 // pred_fallthru
          _
        %v292 = vld [vmem:[#allocation3] sm:$0xf]
        %v293 = vld [vmem:[#allocation3 + $0x4] sm:$0xf]
        %v294 = vld [vmem:[#allocation3 + $0x8] sm:$0xf]
        %v295 = vld [vmem:[#allocation3 + $0xc] sm:$0xf]
        %v296 = vld [vmem:[#allocation3 + $0x10] sm:$0xf]
        %v297 = vld [vmem:[#allocation3 + $0x14] sm:$0xf]
        %v298 = vld [vmem:[#allocation3 + $0x18] sm:$0xf]
        %v299 = vld [vmem:[#allocation3 + $0x1c] sm:$0xf]
        %v300 = vld [vmem:[#allocation3 + $0x20] sm:$0xf]
        %v301 = vld [vmem:[#allocation3 + $0x24] sm:$0xf]
        %v302 = vld [vmem:[#allocation3 + $0x28] sm:$0xf]
        %v303 = vld [vmem:[#allocation3 + $0x2c] sm:$0xf]
        %v304 = vld [vmem:[#allocation3 + $0x30] sm:$0xf]
        %v305 = vld [vmem:[#allocation3 + $0x34] sm:$0xf]
        %v306 = vld [vmem:[#allocation3 + $0x38] sm:$0xf]
        %v307 = vld [vmem:[#allocation3 + $0x3c] sm:$0xf]
        %v308 = vld [vmem:[#allocation2] sm:$0xf]
        %v309 = vld [vmem:[#allocation2 + $0x4] sm:$0xf]
        %v310 = vld [vmem:[#allocation2 + $0x8] sm:$0xf]
        %v311 = vld [vmem:[#allocation2 + $0xc] sm:$0xf]
        %v312 = vld [vmem:[#allocation2 + $0x10] sm:$0xf]
        %v313 = vld [vmem:[#allocation2 + $0x14] sm:$0xf]
        %v314 = vld [vmem:[#allocation2 + $0x18] sm:$0xf]
        %v315 = vld [vmem:[#allocation2 + $0x1c] sm:$0xf]
        %v316 = vld [vmem:[#allocation2 + $0x20] sm:$0xf]
        %v317 = vld [vmem:[#allocation2 + $0x24] sm:$0xf]
        %v318 = vld [vmem:[#allocation2 + $0x28] sm:$0xf]
        %v319 = vld [vmem:[#allocation2 + $0x2c] sm:$0xf]
        %v320 = vld [vmem:[#allocation2 + $0x30] sm:$0xf]
        %v321 = vld [vmem:[#allocation2 + $0x34] sm:$0xf]
        %v322 = vld [vmem:[#allocation2 + $0x38] sm:$0xf]
        %v323 = vld [vmem:[#allocation2 + $0x3c] sm:$0xf]
        %v340 = vunpack.c.l.b16 %v292
        %v341 = vunpack.c.l.b16 %v293
        %v342 = vunpack.c.l.b16 %v294
        %v343 = vunpack.c.l.b16 %v295
        %v344 = vunpack.c.l.b16 %v296
        %v345 = vunpack.c.l.b16 %v297
        %v346 = vunpack.c.l.b16 %v298
        %v347 = vunpack.c.l.b16 %v299
        %v348 = vunpack.c.l.b16 %v300
        %v349 = vunpack.c.l.b16 %v301
        %v350 = vunpack.c.l.b16 %v302
        %v351 = vunpack.c.l.b16 %v303
        %v352 = vunpack.c.l.b16 %v304
        %v353 = vunpack.c.l.b16 %v305
        %v354 = vunpack.c.l.b16 %v306
        %v355 = vunpack.c.l.b16 %v307
        %v356 = vpack.c.b16 %v341, %v340
        %v357 = vpack.c.b16 %v343, %v342
        %v358 = vpack.c.b16 %v345, %v344
        %v359 = vpack.c.b16 %v347, %v346
        %v360 = vpack.c.b16 %v349, %v348
        %v361 = vpack.c.b16 %v351, %v350
        %v362 = vpack.c.b16 %v353, %v352
        %v363 = vpack.c.b16 %v355, %v354
        %v388 = vunpack.c.l.b16 %v308
        %v389 = vunpack.c.l.b16 %v309
        %v390 = vunpack.c.l.b16 %v310
        %v391 = vunpack.c.l.b16 %v311
        %v392 = vunpack.c.l.b16 %v312
        %v393 = vunpack.c.l.b16 %v313
        %v394 = vunpack.c.l.b16 %v314
        %v395 = vunpack.c.l.b16 %v315
        %v396 = vunpack.c.l.b16 %v316
        %v397 = vunpack.c.l.b16 %v317
        %v398 = vunpack.c.l.b16 %v318
        %v399 = vunpack.c.l.b16 %v319
        %v400 = vunpack.c.l.b16 %v320
        %v401 = vunpack.c.l.b16 %v321
        %v402 = vunpack.c.l.b16 %v322
        %v403 = vunpack.c.l.b16 %v323
        %v404 = vpack.c.b16 %v389, %v388
        %v405 = vpack.c.b16 %v391, %v390
        %v406 = vpack.c.b16 %v393, %v392
        %v407 = vpack.c.b16 %v395, %v394
        %v408 = vpack.c.b16 %v397, %v396
        %v409 = vpack.c.b16 %v399, %v398
        %v410 = vpack.c.b16 %v401, %v400
        %v411 = vpack.c.b16 %v403, %v402
        %420 = vmatprep.subr.bf16.mxu0 0
        %421 = vmatpush1.bf16.msra.mxu0 %v411
        %422 = vmatprep.subr.bf16.mxu0 0
        %423 = vmatpush1.bf16.msra.mxu0 %v410
        %424 = vmatprep.subr.bf16.mxu0 0
        %425 = vmatpush1.bf16.msra.mxu0 %v409
        %426 = vmatprep.subr.bf16.mxu0 0
        %427 = vmatpush1.bf16.msra.mxu0 %v408
        %428 = vmatprep.subr.bf16.mxu0 0
        %429 = vmatpush1.bf16.msra.mxu0 %v407
        %430 = vmatprep.subr.bf16.mxu0 0
        %431 = vmatpush1.bf16.msra.mxu0 %v406
        %432 = vmatprep.subr.bf16.mxu0 0
        %433 = vmatpush1.bf16.msra.mxu0 %v405
        %434 = vmatprep.subr.bf16.mxu0 0
        %435 = vmatpush1.bf16.msra.mxu0 %v404
        %436 = vmatprep.subr.bf16.mxu0 0
        %437 = vmatpush2.bf16.msra.mxu0 0
        %438 = vmatprep.subr.bf16.mxu0 0
        %439 = vmatpush2.bf16.msra.mxu0 0
        %440 = vmatprep.subr.bf16.mxu0 0
        %441 = vmatpush2.bf16.msra.mxu0 0
        %442 = vmatprep.subr.bf16.mxu0 0
        %443 = vmatpush2.bf16.msra.mxu0 0
        %444 = vmatprep.subr.bf16.mxu0 0
        %445 = vmatpush2.bf16.msra.mxu0 0
        %446 = vmatprep.subr.bf16.mxu0 0
        %447 = vmatpush2.bf16.msra.mxu0 0
        %448 = vmatprep.subr.bf16.mxu0 0
        %449 = vmatpush2.bf16.msra.mxu0 0
        %450 = vmatprep.subr.bf16.mxu0 0
        %451 = vmatpush2.bf16.msra.mxu0 0
        %452 = vmatprep.mubr.bf16.mxu0 0
        %453 = vmatmul.mubr.bf16.gmra.mxu0 %v356
        %v454 = vpop.f32.mrf.mxu0
        %v455 = vadd.f32 0.0, %v454
        %v456 = vpop.f32.mrf.mxu0
        %v457 = vpop.f32.mrf.mxu0
        %v458 = vadd.f32 0.0, %v457
        %v459 = vpop.f32.mrf.mxu0
        %460 = vmatprep.mubr.bf16.mxu0 0
        %461 = vmatmul.mubr.bf16.gmra.mxu0 %v357
        %v462 = vpop.f32.mrf.mxu0
        %v463 = vadd.f32 0.0, %v462
        %v464 = vpop.f32.mrf.mxu0
        %v465 = vpop.f32.mrf.mxu0
        %v466 = vadd.f32 0.0, %v465
        %v467 = vpop.f32.mrf.mxu0
        %468 = vmatprep.mubr.bf16.mxu0 0
        %469 = vmatmul.mubr.bf16.gmra.mxu0 %v358
        %v470 = vpop.f32.mrf.mxu0
        %v471 = vadd.f32 0.0, %v470
        %v472 = vpop.f32.mrf.mxu0
        %v473 = vpop.f32.mrf.mxu0
        %v474 = vadd.f32 0.0, %v473
        %v475 = vpop.f32.mrf.mxu0
        %476 = vmatprep.mubr.bf16.mxu0 0
        %477 = vmatmul.mubr.bf16.gmra.mxu0 %v359
        %v478 = vpop.f32.mrf.mxu0
        %v479 = vadd.f32 0.0, %v478
        %v480 = vpop.f32.mrf.mxu0
        %v481 = vpop.f32.mrf.mxu0
        %v482 = vadd.f32 0.0, %v481
        %v483 = vpop.f32.mrf.mxu0
        %484 = vmatprep.mubr.bf16.mxu0 0
        %485 = vmatmul.mubr.bf16.gmra.mxu0 %v360
        %v486 = vpop.f32.mrf.mxu0
        %v487 = vadd.f32 0.0, %v486
        %v488 = vpop.f32.mrf.mxu0
        %v489 = vpop.f32.mrf.mxu0
        %v490 = vadd.f32 0.0, %v489
        %v491 = vpop.f32.mrf.mxu0
        %492 = vmatprep.mubr.bf16.mxu0 0
        %493 = vmatmul.mubr.bf16.gmra.mxu0 %v361
        %v494 = vpop.f32.mrf.mxu0
        %v495 = vadd.f32 0.0, %v494
        %v496 = vpop.f32.mrf.mxu0
        %v497 = vpop.f32.mrf.mxu0
        %v498 = vadd.f32 0.0, %v497
        %v499 = vpop.f32.mrf.mxu0
        %500 = vmatprep.mubr.bf16.mxu0 0
        %501 = vmatmul.mubr.bf16.gmra.mxu0 %v362
        %v502 = vpop.f32.mrf.mxu0
        %v503 = vadd.f32 0.0, %v502
        %v504 = vpop.f32.mrf.mxu0
        %v505 = vpop.f32.mrf.mxu0
        %v506 = vadd.f32 0.0, %v505
        %v507 = vpop.f32.mrf.mxu0
        %508 = vmatprep.mubr.bf16.mxu0 0
        %509 = vmatmul.mubr.bf16.gmra.mxu0 %v363
        %v510 = vpop.f32.mrf.mxu0
        %v511 = vadd.f32 0.0, %v510
        %v512 = vpop.f32.mrf.mxu0
        %v513 = vpop.f32.mrf.mxu0
        %v514 = vadd.f32 0.0, %v513
        %v515 = vpop.f32.mrf.mxu0
        %516 = vdwg.mxu0
        %v517 = vpack.c.bf16 %v458, %v455
        %v518 = vpack.c.bf16 %v466, %v463
        %v519 = vpack.c.bf16 %v474, %v471
        %v520 = vpack.c.bf16 %v482, %v479
        %v521 = vpack.c.bf16 %v490, %v487
        %v522 = vpack.c.bf16 %v498, %v495
        %v523 = vpack.c.bf16 %v506, %v503
        %v524 = vpack.c.bf16 %v514, %v511
        %v525 = vld [vmem:[%s251] sm:$0xf]
        %v526 = vld [vmem:[%s251 + $0x4] sm:$0xf]
        %v527 = vld [vmem:[%s251 + $0x8] sm:$0xf]
        %v528 = vld [vmem:[%s251 + $0xc] sm:$0xf]
        %v529 = vld [vmem:[%s251 + $0x10] sm:$0xf]
        %v530 = vld [vmem:[%s251 + $0x14] sm:$0xf]
        %v531 = vld [vmem:[%s251 + $0x18] sm:$0xf]
        %v532 = vld [vmem:[%s251 + $0x1c] sm:$0xf]
        %v533 = vld [vmem:[%s251 + $0x20] sm:$0xf]
        %v534 = vld [vmem:[%s251 + $0x24] sm:$0xf]
        %v535 = vld [vmem:[%s251 + $0x28] sm:$0xf]
        %v536 = vld [vmem:[%s251 + $0x2c] sm:$0xf]
        %v537 = vld [vmem:[%s251 + $0x30] sm:$0xf]
        %v538 = vld [vmem:[%s251 + $0x34] sm:$0xf]
        %v539 = vld [vmem:[%s251 + $0x38] sm:$0xf]
        %v540 = vld [vmem:[%s251 + $0x3c] sm:$0xf]
        %v541 = vld [vmem:[%s2] sm:$0xff]
        %v542 = vld [vmem:[%s2 + $0x8] sm:$0xff]
        %v543 = vld [vmem:[%s2 + $0x10] sm:$0xff]
        %v544 = vld [vmem:[%s2 + $0x18] sm:$0xff]
        %v545 = vld [vmem:[%s2 + $0x20] sm:$0xff]
        %v546 = vld [vmem:[%s2 + $0x28] sm:$0xff]
        %v547 = vld [vmem:[%s2 + $0x30] sm:$0xff]
        %v548 = vld [vmem:[%s2 + $0x38] sm:$0xff]
        %v549 = vld [vmem:[%s2 + $0x40] sm:$0xff]
        %v550 = vld [vmem:[%s2 + $0x48] sm:$0xff]
        %v551 = vld [vmem:[%s2 + $0x50] sm:$0xff]
        %v552 = vld [vmem:[%s2 + $0x58] sm:$0xff]
        %v553 = vld [vmem:[%s2 + $0x60] sm:$0xff]
        %v554 = vld [vmem:[%s2 + $0x68] sm:$0xff]
        %v555 = vld [vmem:[%s2 + $0x70] sm:$0xff]
        %v556 = vld [vmem:[%s2 + $0x78] sm:$0xff]
        %v557 = vld [vmem:[%s254] sm:$0x1]
        %559 = vset.pattern.permute.xlu0 0
        %560 = vperm.xlu0 %559, %v541
        %v561 = vpop.permute.xlu0 %560
        %564 = vset.pattern.permute.xlu0 0
        %565 = vperm.xlu0 %564, %v542
        %v566 = vpop.permute.xlu0 %565
        %569 = vset.pattern.permute.xlu0 0
        %570 = vperm.xlu0 %569, %v543
        %v571 = vpop.permute.xlu0 %570
        %574 = vset.pattern.permute.xlu0 0
        %575 = vperm.xlu0 %574, %v544
        %v576 = vpop.permute.xlu0 %575
        %579 = vset.pattern.permute.xlu0 0
        %580 = vperm.xlu0 %579, %v545
        %v581 = vpop.permute.xlu0 %580
        %584 = vset.pattern.permute.xlu0 0
        %585 = vperm.xlu0 %584, %v546
        %v586 = vpop.permute.xlu0 %585
        %589 = vset.pattern.permute.xlu0 0
        %590 = vperm.xlu0 %589, %v547
        %v591 = vpop.permute.xlu0 %590
        %594 = vset.pattern.permute.xlu0 0
        %595 = vperm.xlu0 %594, %v548
        %v596 = vpop.permute.xlu0 %595
        %599 = vset.pattern.permute.xlu0 0
        %600 = vperm.xlu0 %599, %v549
        %v601 = vpop.permute.xlu0 %600
        %604 = vset.pattern.permute.xlu0 0
        %605 = vperm.xlu0 %604, %v550
        %v606 = vpop.permute.xlu0 %605
        %609 = vset.pattern.permute.xlu0 0
        %610 = vperm.xlu0 %609, %v551
        %v611 = vpop.permute.xlu0 %610
        %614 = vset.pattern.permute.xlu0 0
        %615 = vperm.xlu0 %614, %v552
        %v616 = vpop.permute.xlu0 %615
        %619 = vset.pattern.permute.xlu0 0
        %620 = vperm.xlu0 %619, %v553
        %v621 = vpop.permute.xlu0 %620
        %624 = vset.pattern.permute.xlu0 0
        %625 = vperm.xlu0 %624, %v554
        %v626 = vpop.permute.xlu0 %625
        %629 = vset.pattern.permute.xlu0 0
        %630 = vperm.xlu0 %629, %v555
        %v631 = vpop.permute.xlu0 %630
        %634 = vset.pattern.permute.xlu0 0
        %635 = vperm.xlu0 %634, %v556
        %v636 = vpop.permute.xlu0 %635
        %v639 = vlaneseq
        %v640 = vshrl.u32 %v639, 7
        %v641 = vsub.s32 0, %v640
        %v642 = vrot.slane %v557, %v641
        %v644 = vmul.f32 %v561, %v642
        %v645 = vmul.f32 %v566, %v642
        %v646 = vmul.f32 %v571, %v642
        %v647 = vmul.f32 %v576, %v642
        %v648 = vmul.f32 %v581, %v642
        %v649 = vmul.f32 %v586, %v642
        %v650 = vmul.f32 %v591, %v642
        %v651 = vmul.f32 %v596, %v642
        %v652 = vmul.f32 %v601, %v642
        %v653 = vmul.f32 %v606, %v642
        %v654 = vmul.f32 %v611, %v642
        %v655 = vmul.f32 %v616, %v642
        %v656 = vmul.f32 %v621, %v642
        %v657 = vmul.f32 %v626, %v642
        %v658 = vmul.f32 %v631, %v642
        %v659 = vmul.f32 %v636, %v642
        %v676 = vunpack.c.l.b16 %v525
        %v677 = vunpack.c.l.b16 %v526
        %v678 = vunpack.c.l.b16 %v527
        %v679 = vunpack.c.l.b16 %v528
        %v680 = vunpack.c.l.b16 %v529
        %v681 = vunpack.c.l.b16 %v530
        %v682 = vunpack.c.l.b16 %v531
        %v683 = vunpack.c.l.b16 %v532
        %v684 = vunpack.c.l.b16 %v533
        %v685 = vunpack.c.l.b16 %v534
        %v686 = vunpack.c.l.b16 %v535
        %v687 = vunpack.c.l.b16 %v536
        %v688 = vunpack.c.l.b16 %v537
        %v689 = vunpack.c.l.b16 %v538
        %v690 = vunpack.c.l.b16 %v539
        %v691 = vunpack.c.l.b16 %v540
        %v692 = vpack.c.b16 %v677, %v676
        %v693 = vpack.c.b16 %v679, %v678
        %v694 = vpack.c.b16 %v681, %v680
        %v695 = vpack.c.b16 %v683, %v682
        %v696 = vpack.c.b16 %v685, %v684
        %v697 = vpack.c.b16 %v687, %v686
        %v698 = vpack.c.b16 %v689, %v688
        %v699 = vpack.c.b16 %v691, %v690
        %708 = vmatprep.subr.bf16.mxu0 0
        %709 = vmatpush1.bf16.msra.mxu0 %v699
        %710 = vmatprep.subr.bf16.mxu0 0
        %711 = vmatpush1.bf16.msra.mxu0 %v698
        %712 = vmatprep.subr.bf16.mxu0 0
        %713 = vmatpush1.bf16.msra.mxu0 %v697
        %714 = vmatprep.subr.bf16.mxu0 0
        %715 = vmatpush1.bf16.msra.mxu0 %v696
        %716 = vmatprep.subr.bf16.mxu0 0
        %717 = vmatpush1.bf16.msra.mxu0 %v695
        %718 = vmatprep.subr.bf16.mxu0 0
        %719 = vmatpush1.bf16.msra.mxu0 %v694
        %720 = vmatprep.subr.bf16.mxu0 0
        %721 = vmatpush1.bf16.msra.mxu0 %v693
        %722 = vmatprep.subr.bf16.mxu0 0
        %723 = vmatpush1.bf16.msra.mxu0 %v692
        %724 = vmatprep.subr.bf16.mxu0 0
        %725 = vmatpush2.bf16.msra.mxu0 0
        %726 = vmatprep.subr.bf16.mxu0 0
        %727 = vmatpush2.bf16.msra.mxu0 0
        %728 = vmatprep.subr.bf16.mxu0 0
        %729 = vmatpush2.bf16.msra.mxu0 0
        %730 = vmatprep.subr.bf16.mxu0 0
        %731 = vmatpush2.bf16.msra.mxu0 0
        %732 = vmatprep.subr.bf16.mxu0 0
        %733 = vmatpush2.bf16.msra.mxu0 0
        %734 = vmatprep.subr.bf16.mxu0 0
        %735 = vmatpush2.bf16.msra.mxu0 0
        %736 = vmatprep.subr.bf16.mxu0 0
        %737 = vmatpush2.bf16.msra.mxu0 0
        %738 = vmatprep.subr.bf16.mxu0 0
        %739 = vmatpush2.bf16.msra.mxu0 0
        %740 = vmatprep.mubr.bf16.mxu0 0
        %741 = vmatmul.mubr.bf16.gmra.mxu0 %v517
        %v742 = vpop.f32.mrf.mxu0
        %v743 = vadd.f32 %v644, %v742
        %v744 = vpop.f32.mrf.mxu0
        %v745 = vpop.f32.mrf.mxu0
        %v746 = vadd.f32 %v645, %v745
        %v747 = vpop.f32.mrf.mxu0
        %748 = vmatprep.mubr.bf16.mxu0 0
        %749 = vmatmul.mubr.bf16.gmra.mxu0 %v518
        %v750 = vpop.f32.mrf.mxu0
        %v751 = vadd.f32 %v646, %v750
        %v752 = vpop.f32.mrf.mxu0
        %v753 = vpop.f32.mrf.mxu0
        %v754 = vadd.f32 %v647, %v753
        %v755 = vpop.f32.mrf.mxu0
        %756 = vmatprep.mubr.bf16.mxu0 0
        %757 = vmatmul.mubr.bf16.gmra.mxu0 %v519
        %v758 = vpop.f32.mrf.mxu0
        %v759 = vadd.f32 %v648, %v758
        %v760 = vpop.f32.mrf.mxu0
        %v761 = vpop.f32.mrf.mxu0
        %v762 = vadd.f32 %v649, %v761
        %v763 = vpop.f32.mrf.mxu0
        %764 = vmatprep.mubr.bf16.mxu0 0
        %765 = vmatmul.mubr.bf16.gmra.mxu0 %v520
        %v766 = vpop.f32.mrf.mxu0
        %v767 = vadd.f32 %v650, %v766
        %v768 = vpop.f32.mrf.mxu0
        %v769 = vpop.f32.mrf.mxu0
        %v770 = vadd.f32 %v651, %v769
        %v771 = vpop.f32.mrf.mxu0
        %772 = vmatprep.mubr.bf16.mxu0 0
        %773 = vmatmul.mubr.bf16.gmra.mxu0 %v521
        %v774 = vpop.f32.mrf.mxu0
        %v775 = vadd.f32 %v652, %v774
        %v776 = vpop.f32.mrf.mxu0
        %v777 = vpop.f32.mrf.mxu0
        %v778 = vadd.f32 %v653, %v777
        %v779 = vpop.f32.mrf.mxu0
        %780 = vmatprep.mubr.bf16.mxu0 0
        %781 = vmatmul.mubr.bf16.gmra.mxu0 %v522
        %v782 = vpop.f32.mrf.mxu0
        %v783 = vadd.f32 %v654, %v782
        %v784 = vpop.f32.mrf.mxu0
        %v785 = vpop.f32.mrf.mxu0
        %v786 = vadd.f32 %v655, %v785
        %v787 = vpop.f32.mrf.mxu0
        %788 = vmatprep.mubr.bf16.mxu0 0
        %789 = vmatmul.mubr.bf16.gmra.mxu0 %v523
        %v790 = vpop.f32.mrf.mxu0
        %v791 = vadd.f32 %v656, %v790
        %v792 = vpop.f32.mrf.mxu0
        %v793 = vpop.f32.mrf.mxu0
        %v794 = vadd.f32 %v657, %v793
        %v795 = vpop.f32.mrf.mxu0
        %796 = vmatprep.mubr.bf16.mxu0 0
        %797 = vmatmul.mubr.bf16.gmra.mxu0 %v524
        %v798 = vpop.f32.mrf.mxu0
        %v799 = vadd.f32 %v658, %v798
        %v800 = vpop.f32.mrf.mxu0
        %v801 = vpop.f32.mrf.mxu0
        %v802 = vadd.f32 %v659, %v801
        %v803 = vpop.f32.mrf.mxu0
        %804 = vdwg.mxu0
        %v805 = vmax.f32 %v743, 0.0
        %v806 = vmax.f32 %v746, 0.0
        %v807 = vmax.f32 %v751, 0.0
        %v808 = vmax.f32 %v754, 0.0
        %v809 = vmax.f32 %v759, 0.0
        %v810 = vmax.f32 %v762, 0.0
        %v811 = vmax.f32 %v767, 0.0
        %v812 = vmax.f32 %v770, 0.0
        %v813 = vmax.f32 %v775, 0.0
        %v814 = vmax.f32 %v778, 0.0
        %v815 = vmax.f32 %v783, 0.0
        %v816 = vmax.f32 %v786, 0.0
        %v817 = vmax.f32 %v791, 0.0
        %v818 = vmax.f32 %v794, 0.0
        %v819 = vmax.f32 %v799, 0.0
        %v820 = vmax.f32 %v802, 0.0
        %v821 = vpack.c.bf16 %v806, %v805
        %v822 = vpack.c.bf16 %v808, %v807
        %v823 = vpack.c.bf16 %v810, %v809
        %v824 = vpack.c.bf16 %v812, %v811
        %v825 = vpack.c.bf16 %v814, %v813
        %v826 = vpack.c.bf16 %v816, %v815
        %v827 = vpack.c.bf16 %v818, %v817
        %v828 = vpack.c.bf16 %v820, %v819
        %v837 = vunpack.c.l.b16 %v821
        %v838 = vunpack.c.h.b16 %v821
        %v839 = vunpack.c.l.b16 %v822
        %v840 = vunpack.c.h.b16 %v822
        %v841 = vunpack.c.l.b16 %v823
        %v842 = vunpack.c.h.b16 %v823
        %v843 = vunpack.c.l.b16 %v824
        %v844 = vunpack.c.h.b16 %v824
        %v845 = vunpack.c.l.b16 %v825
        %v846 = vunpack.c.h.b16 %v825
        %v847 = vunpack.c.l.b16 %v826
        %v848 = vunpack.c.h.b16 %v826
        %v849 = vunpack.c.l.b16 %v827
        %v850 = vunpack.c.h.b16 %v827
        %v851 = vunpack.c.l.b16 %v828
        %v852 = vunpack.c.h.b16 %v828
        %v853 = vpack.c.b16 %v837, %v837
        %v854 = vpack.c.b16 %v838, %v838
        %v855 = vpack.c.b16 %v839, %v839
        %v856 = vpack.c.b16 %v840, %v840
        %v857 = vpack.c.b16 %v841, %v841
        %v858 = vpack.c.b16 %v842, %v842
        %v859 = vpack.c.b16 %v843, %v843
        %v860 = vpack.c.b16 %v844, %v844
        %v861 = vpack.c.b16 %v845, %v845
        %v862 = vpack.c.b16 %v846, %v846
        %v863 = vpack.c.b16 %v847, %v847
        %v864 = vpack.c.b16 %v848, %v848
        %v865 = vpack.c.b16 %v849, %v849
        %v866 = vpack.c.b16 %v850, %v850
        %v867 = vpack.c.b16 %v851, %v851
        %v868 = vpack.c.b16 %v852, %v852
        %885 = vst [vmem:[#allocation2] sm:$0xf] %v853
        %886 = vst [vmem:[#allocation2 + $0x4] sm:$0xf] %v854
        %887 = vst [vmem:[#allocation2 + $0x8] sm:$0xf] %v855
        %888 = vst [vmem:[#allocation2 + $0xc] sm:$0xf] %v856
        %889 = vst [vmem:[#allocation2 + $0x10] sm:$0xf] %v857
        %890 = vst [vmem:[#allocation2 + $0x14] sm:$0xf] %v858
        %891 = vst [vmem:[#allocation2 + $0x18] sm:$0xf] %v859
        %892 = vst [vmem:[#allocation2 + $0x1c] sm:$0xf] %v860
        %893 = vst [vmem:[#allocation2 + $0x20] sm:$0xf] %v861
        %894 = vst [vmem:[#allocation2 + $0x24] sm:$0xf] %v862
        %895 = vst [vmem:[#allocation2 + $0x28] sm:$0xf] %v863
        %896 = vst [vmem:[#allocation2 + $0x2c] sm:$0xf] %v864
        %897 = vst [vmem:[#allocation2 + $0x30] sm:$0xf] %v865
        %898 = vst [vmem:[#allocation2 + $0x34] sm:$0xf] %v866
        %899 = vst [vmem:[#allocation2 + $0x38] sm:$0xf] %v867
        %900 = vst [vmem:[#allocation2 + $0x3c] sm:$0xf] %v868
        %p901 = scmp.eq.s32.totalorder %s19, 1
        // Predicated region
        $region53: #{tpu_custom_call.1} parent=39 // pred_check
          %p902 = pneg %p901
        $region54: #{tpu_custom_call.1} parent=39 // pred_check_branch
          %904 = sbr.rel (%p902) target = $region56
        $region55: #{tpu_custom_call.1} parent=39 // pred_region
          %905 = vst [vmem:[#allocation8] sm:$0xff] %v805
          %906 = vst [vmem:[#allocation8 + $0x8] sm:$0xff] %v806
          %907 = vst [vmem:[#allocation8 + $0x10] sm:$0xff] %v807
          %908 = vst [vmem:[#allocation8 + $0x18] sm:$0xff] %v808
          %909 = vst [vmem:[#allocation8 + $0x20] sm:$0xff] %v809
          %910 = vst [vmem:[#allocation8 + $0x28] sm:$0xff] %v810
          %911 = vst [vmem:[#allocation8 + $0x30] sm:$0xff] %v811
          %912 = vst [vmem:[#allocation8 + $0x38] sm:$0xff] %v812
          %913 = vst [vmem:[#allocation8 + $0x40] sm:$0xff] %v813
          %914 = vst [vmem:[#allocation8 + $0x48] sm:$0xff] %v814
          %915 = vst [vmem:[#allocation8 + $0x50] sm:$0xff] %v815
          %916 = vst [vmem:[#allocation8 + $0x58] sm:$0xff] %v816
          %917 = vst [vmem:[#allocation8 + $0x60] sm:$0xff] %v817
          %918 = vst [vmem:[#allocation8 + $0x68] sm:$0xff] %v818
          %919 = vst [vmem:[#allocation8 + $0x70] sm:$0xff] %v819
          %920 = vst [vmem:[#allocation8 + $0x78] sm:$0xff] %v820
        $region56: #{tpu_custom_call.1} parent=39 // pred_fallthru
          _
        // Predicated region
        $region57: #{tpu_custom_call.1} parent=39 // pred_check
          %p921 = pneg %p147
        $region58: #{tpu_custom_call.1} parent=39 // pred_check_branch
          %923 = sbr.rel (%p921) target = $region60
        $region59: #{tpu_custom_call.1} parent=39 // pred_region
          %s925 = ssub.s32 2048, 2048
          %926 = vsyncadd [#allocation5], %s925
          %s927 = sshll.u32 [#allocation8], 4
          %s928 = int_to_ptr.vmem [resolvable:$true] %s927
          %933 = dma.vmem_to_hbm [thread:$0]  %s928, 2048, %s5, [#allocation5], 128, 128, 8
        $region60: #{tpu_custom_call.1} parent=39 // pred_fallthru
          _
        // Predicated region
        $region61: #{tpu_custom_call.1} parent=39 // pred_check
          %p934 = pneg %p147
        $region62: #{tpu_custom_call.1} parent=39 // pred_check_branch
          %936 = sbr.rel (%p934) target = $region64
        $region63: #{tpu_custom_call.1} parent=39 // pred_region
          %937 = dma.done [#allocation5], 2048
        $region64: #{tpu_custom_call.1} parent=39 // pred_fallthru
          _
      $region40: #{tpu_custom_call.1} parent=5 // pred_fallthru
        _
      %p938 = scmp.le.s32.totalorder 2, %s14
      // Predicated region
      $region65: #{tpu_custom_call.1} parent=5 // pred_check
        %p939 = pneg %p938
      $region66: #{tpu_custom_call.1} parent=5 // pred_check_branch
        %941 = sbr.rel (%p939) target = $region68
      $region67: #{tpu_custom_call.1} parent=5 // pred_region
        %s942 = ssub.s32 %s14, 2
      $region68: #{tpu_custom_call.1} parent=5 // pred_fallthru
        _
    $region6: #{tpu_custom_call.1} parent=1 // loop_footer
      %s18 = sadd.s32 1, %s14
    $region7: #{tpu_custom_call.1} parent=1 // loop_footer_branch
      %13 = sbr.rel target = $region3
    $region8: #{tpu_custom_call.1} parent=1 // loop_exit
      _
    %943 = vsyncpa [#allocation4], 1
    %s944 = scalar_lea.sflag [#allocation4], 1
    %945 = vsyncpa %s944, 1
    %946 = vsyncpa [#allocation7], 1
    %947 = vsyncpa [#allocation5], 1
    %s948 = scalar_lea.sflag [#allocation5], 1
    %949 = vsyncpa %s948, 1

</llo_original>
